<compile_context>
chip_gen: v5e
topology: v5e:2x2
jax: 0.10.0
libtpu: 0.0.40
codegen_flags: <defaults>
</compile_context>

<pallas_src>
import jax
import jax.numpy as jnp
from jax.experimental import pallas as pl
from jax.experimental.pallas import tpu as pltpu


def _round_up(x, m):
    return ((x + m - 1) // m) * m


def _choose_tm(B, tm_max):
    """Pick a batch-tile size that (a) is legal for the (8,128) rule,
    (b) minimizes row waste for awkward B, and (c) yields >= 2 grid steps
    when B > 8 so the 'parallel' axis shards across both v7x TensorCores."""
    tm_max = max(8, _round_up(int(tm_max), 8))
    if B > 8:
        tm_max = min(tm_max, _round_up(pl.cdiv(B, 2), 8))
    n_tiles = pl.cdiv(B, tm_max)
    if n_tiles == 1:
        # Single tile: use the full batch extent (always legal, no clamping).
        return B
    return _round_up(pl.cdiv(B, n_tiles), 8)


# ----------------------------------------------------------------------------
# Pallas kernel: fused  (x @ W1 + b1) -> ReLU -> (h @ W2 + b2)
#   x_ref : (TM, 512)  f32       w1_ref: (512, 128)     bf16   b1_ref: (1, 128)     f32
#   w2_ref: (128, dim_tex) bf16  b2_ref: (1, dim_tex)   f32    o_ref : (TM, dim_tex)
# ----------------------------------------------------------------------------
def _texmapper_kernel(x_ref, w1_ref, b1_ref, w2_ref, b2_ref, o_ref):
    # Cast x to bf16 at the point of use (VPU op hidden under the x DMA) —
    # no separate wrapper-side cast pass over x in HBM.
    x = x_ref[...].astype(jnp.bfloat16)
    # First linear layer on the MXU (bf16 inputs, f32 accumulation) + bias.
    h = jnp.dot(x, w1_ref[...], preferred_element_type=jnp.float32)
    # Bias add + ReLU on the VPU, in f32 (v5e has no bf16 VPU path).
    h = jnp.maximum(h + b1_ref[...], 0.0)
    # Second linear layer + bias. Cast hidden activations to bf16 for the MXU.
    y = jnp.dot(h.astype(w2_ref.dtype), w2_ref[...],
                preferred_element_type=jnp.float32)
    o_ref[...] = (y + b2_ref[...]).astype(o_ref.dtype)


def tex_mapper_forward(x, w1, b1, w2, b2, *, tm=1024, out_dtype=jnp.float32):
    """Fused TexMapper forward pass as a single batch-tiled Pallas call.

    x : (B, 512) float32 (cast to bf16 inside the kernel)
    w1: (512, 128) bf16     b1: (1, 128) f32
    w2: (128, dim_tex) bf16 b2: (1, dim_tex) f32
       (use prepare_tex_mapper_params once to produce these dtypes)
    returns (B, dim_tex) in out_dtype (f32 default; pass bf16 to halve the
    output writeback if the consumer tolerates it).
    """
    B, d_in = x.shape
    d_hidden = w1.shape[1]
    dim_tex = w2.shape[1]

    tm = _choose_tm(B, tm)
    grid = (pl.cdiv(B, tm),)

    rows = grid[0] * tm  # includes the clamped final tile, for the estimate
    flops = 2 * rows * (d_in * d_hidden + d_hidden * dim_tex)
    bytes_accessed = (x.size * x.dtype.itemsize
                      + w1.size * w1.dtype.itemsize + b1.size * b1.dtype.itemsize
                      + w2.size * w2.dtype.itemsize + b2.size * b2.dtype.itemsize
                      + B * dim_tex * jnp.dtype(out_dtype).itemsize)

    return pl.pallas_call(
        _texmapper_kernel,
        out_shape=jax.ShapeDtypeStruct((B, dim_tex), out_dtype),
        grid_spec=pltpu.PrefetchScalarGridSpec(
            num_scalar_prefetch=0,
            grid=grid,
            in_specs=[
                # x: one batch tile per grid step (double-buffered by Pallas);
                # the ragged final tile is clamped/masked by Pallas — no pad.
                pl.BlockSpec((tm, d_in), lambda i: (i, 0)),
                # Weights / biases: index_map independent of i -> DMA'd once,
                # pinned in VMEM for the whole grid.
                pl.BlockSpec((d_in, d_hidden), lambda i: (0, 0)),
                pl.BlockSpec((1, d_hidden), lambda i: (0, 0)),
                pl.BlockSpec((d_hidden, dim_tex), lambda i: (0, 0)),
                pl.BlockSpec((1, dim_tex), lambda i: (0, 0)),
            ],
            out_specs=pl.BlockSpec((tm, dim_tex), lambda i: (i, 0)),
        ),
        compiler_params=pltpu.CompilerParams(
            # Batch tiles are independent -> shard across TCs on v7x megacore.
            dimension_semantics=("parallel",),
        ),
        cost_estimate=pl.CostEstimate(
            flops=flops, transcendentals=0, bytes_accessed=bytes_accessed),
    )(x, w1, b1, w2, b2)


# ----------------------------------------------------------------------------
# Parameter construction / one-time prep (hoisted out of the per-call path).
# ----------------------------------------------------------------------------
def init_tex_mapper_params(key, d_in=512, d_hidden=128, dim_tex=64,
                           dtype=jnp.float32):
    """Deterministic synthetic params, nn.Linear-style init (W transposed)."""
    k1, k2, k3, k4 = jax.random.split(key, 4)
    bound1 = 1.0 / jnp.sqrt(d_in)
    bound2 = 1.0 / jnp.sqrt(d_hidden)
    w1 = jax.random.uniform(k1, (d_in, d_hidden), dtype, -bound1, bound1)
    b1 = jax.random.uniform(k2, (1, d_hidden), dtype, -bound1, bound1)
    w2 = jax.random.uniform(k3, (d_hidden, dim_tex), dtype, -bound2, bound2)
    b2 = jax.random.uniform(k4, (1, dim_tex), dtype, -bound2, bound2)
    return w1, b1, w2, b2


def prepare_tex_mapper_params(w1, b1, w2, b2):
    """One-time dtype prep: bf16 weights for the MXU, f32 biases for the VPU
    epilogue. Call once at parameter-load time, not per forward call."""
    return (w1.astype(jnp.bfloat16),
            b1.astype(jnp.float32).reshape(1, -1),
            w2.astype(jnp.bfloat16),
            b2.astype(jnp.float32).reshape(1, -1))


def tex_mapper_reference(x, w1, b1, w2, b2):
    """Pure-JAX f32 reference for correctness checking."""
    h = jnp.maximum(x @ w1 + b1, 0.0)
    return h @ w2 + b2


if __name__ == "__main__":
    key = jax.random.PRNGKey(0)
    k_x, k_p, k_x2 = jax.random.split(key, 3)

    B = 2          # batch
    D_IN = 512     # MappingNetwork input dim
    D_HID = 128    # MappingNetwork hidden dim
    DIM_TEX = 64   # dim_tex (small synthetic choice)

    # f32 "master" params (as a PyTorch checkpoint would be) + one-time prep.
    w1, b1, w2, b2 = init_tex_mapper_params(k_p, D_IN, D_HID, DIM_TEX)
    params = prepare_tex_mapper_params(w1, b1, w2, b2)

    # --- main check: tiny batch (B=2), single grid point ----------------------
    x = jax.random.normal(k_x, (B, D_IN), dtype=jnp.float32)
    out = jax.block_until_ready(tex_mapper_forward(x, *params))
    ref = tex_mapper_reference(x, w1, b1, w2, b2)
    assert out.shape == (B, DIM_TEX), out.shape
    # bf16 MXU inputs -> ~1e-2-level error vs. the f32 reference (intentional).
    assert jnp.allclose(out, ref, atol=5e-2, rtol=5e-2), "mismatch vs reference"

    # --- secondary check: multi-tile grid with a ragged final tile ------------
    B2 = 20
    x2 = jax.random.normal(k_x2, (B2, D_IN), dtype=jnp.float32)
    out2 = jax.block_until_ready(tex_mapper_forward(x2, *params, tm=8))
    ref2 = tex_mapper_reference(x2, w1, b1, w2, b2)
    assert out2.shape == (B2, DIM_TEX), out2.shape
    assert jnp.allclose(out2, ref2, atol=5e-2, rtol=5e-2), "mismatch (tiled/ragged)"

    print("KERNEL_OK")
</pallas_src>

<mosaic_0001>
module attributes {stable_mosaic.version = 11 : i64} {
  func.func @_texmapper_kernel(%arg0: i32, %arg1: memref<2x512xf32, #tpu.memory_space<vmem>>, %arg2: memref<512x128xbf16, #tpu.memory_space<vmem>>, %arg3: memref<1x128xf32, #tpu.memory_space<vmem>>, %arg4: memref<128x64xbf16, #tpu.memory_space<vmem>>, %arg5: memref<1x64xf32, #tpu.memory_space<vmem>>, %arg6: memref<2x64xf32, #tpu.memory_space<vmem>>) attributes {dimension_semantics = [#tpu.dimension_semantics<parallel>], iteration_bounds = array<i64: 1>, scalar_prefetch = 0 : i64, scratch_operands = 0 : i64, tpu.core_type = #tpu.core_type<tc>, window_params = [{transform_indices = @transform_0, window_bounds = array<i64: 2, 512>}, {pipeline_mode = #tpu.pipeline_mode<synchronous>, transform_indices = @transform_1, window_bounds = array<i64: 512, 128>}, {pipeline_mode = #tpu.pipeline_mode<synchronous>, transform_indices = @transform_2, window_bounds = array<i64: 1, 128>}, {pipeline_mode = #tpu.pipeline_mode<synchronous>, transform_indices = @transform_3, window_bounds = array<i64: 128, 64>}, {pipeline_mode = #tpu.pipeline_mode<synchronous>, transform_indices = @transform_4, window_bounds = array<i64: 1, 64>}, {transform_indices = @transform_5, window_bounds = array<i64: 2, 64>}]} {
    %c0 = arith.constant 0 : index
    %c0_0 = arith.constant 0 : index
    %0 = vector.load %arg1[%c0, %c0_0] : memref<2x512xf32, #tpu.memory_space<vmem>>, vector<2x512xf32>
    %1 = arith.truncf %0 : vector<2x512xf32> to vector<2x512xbf16>
    %c0_1 = arith.constant 0 : index
    %c0_2 = arith.constant 0 : index
    %2 = vector.load %arg2[%c0_1, %c0_2] : memref<512x128xbf16, #tpu.memory_space<vmem>>, vector<512x128xbf16>
    %cst = arith.constant dense<0.000000e+00> : vector<2x128xf32>
    %3 = tpu.matmul %1, %2, %cst {dimension_numbers = #tpu.dot_dimension_numbers<[1], [0], [0], [1], [0, 0, 1, 1], [], []>} : vector<2x512xbf16>, vector<512x128xbf16>, vector<2x128xf32> -> vector<2x128xf32>
    %c0_3 = arith.constant 0 : index
    %c0_4 = arith.constant 0 : index
    %4 = vector.load %arg3[%c0_3, %c0_4] : memref<1x128xf32, #tpu.memory_space<vmem>>, vector<1x128xf32>
    %5 = vector.broadcast %4 : vector<1x128xf32> to vector<2x128xf32>
    %6 = arith.addf %3, %5 : vector<2x128xf32>
    %cst_5 = arith.constant 0.000000e+00 : f32
    %7 = vector.broadcast %cst_5 : f32 to vector<2x128xf32>
    %8 = arith.maximumf %6, %7 : vector<2x128xf32>
    %9 = arith.truncf %8 : vector<2x128xf32> to vector<2x128xbf16>
    %c0_6 = arith.constant 0 : index
    %c0_7 = arith.constant 0 : index
    %10 = vector.load %arg4[%c0_6, %c0_7] : memref<128x64xbf16, #tpu.memory_space<vmem>>, vector<128x64xbf16>
    %cst_8 = arith.constant dense<0.000000e+00> : vector<2x64xf32>
    %11 = tpu.matmul %9, %10, %cst_8 {dimension_numbers = #tpu.dot_dimension_numbers<[1], [0], [0], [1], [0, 0, 1, 1], [], []>} : vector<2x128xbf16>, vector<128x64xbf16>, vector<2x64xf32> -> vector<2x64xf32>
    %c0_9 = arith.constant 0 : index
    %c0_10 = arith.constant 0 : index
    %12 = vector.load %arg5[%c0_9, %c0_10] : memref<1x64xf32, #tpu.memory_space<vmem>>, vector<1x64xf32>
    %13 = vector.broadcast %12 : vector<1x64xf32> to vector<2x64xf32>
    %14 = arith.addf %11, %13 : vector<2x64xf32>
    %c0_11 = arith.constant 0 : index
    %c0_12 = arith.constant 0 : index
    %15 = vector.load %arg6[%c0_11, %c0_12] : memref<2x64xf32, #tpu.memory_space<vmem>>, vector<2x64xf32>
    tpu.vector_store %arg6[%c0_11, %c0_12], %14 {strides = array<i32>} : memref<2x64xf32, #tpu.memory_space<vmem>>, vector<2x64xf32>,
    return
  }
  func.func @transform_0(%arg0: i32) -> (i32, i32) {
    %c0_i32 = arith.constant 0 : i32
    %c0_i32_0 = arith.constant 0 : i32
    return %arg0, %c0_i32 : i32, i32
  }
  func.func @transform_1(%arg0: i32) -> (i32, i32) {
    %c0_i32 = arith.constant 0 : i32
    %c0_i32_0 = arith.constant 0 : i32
    %c0_i32_1 = arith.constant 0 : i32
    return %c0_i32, %c0_i32_0 : i32, i32
  }
  func.func @transform_2(%arg0: i32) -> (i32, i32) {
    %c0_i32 = arith.constant 0 : i32
    %c0_i32_0 = arith.constant 0 : i32
    %c0_i32_1 = arith.constant 0 : i32
    return %c0_i32, %c0_i32_0 : i32, i32
  }
  func.func @transform_3(%arg0: i32) -> (i32, i32) {
    %c0_i32 = arith.constant 0 : i32
    %c0_i32_0 = arith.constant 0 : i32
    %c0_i32_1 = arith.constant 0 : i32
    return %c0_i32, %c0_i32_0 : i32, i32
  }
  func.func @transform_4(%arg0: i32) -> (i32, i32) {
    %c0_i32 = arith.constant 0 : i32
    %c0_i32_0 = arith.constant 0 : i32
    %c0_i32_1 = arith.constant 0 : i32
    return %c0_i32, %c0_i32_0 : i32, i32
  }
  func.func @transform_5(%arg0: i32) -> (i32, i32) {
    %c0_i32 = arith.constant 0 : i32
    %c0_i32_0 = arith.constant 0 : i32
    return %arg0, %c0_i32 : i32, i32
  }
}

</mosaic_0001>

<llo_original>
// kernel: tpu_custom_call.1
$region0: #{tpu_custom_call.1}
  #allocation0 [shape = 'u32[]', space=smem, size = 0x4, offset = 0x4, fixed_abs, tag = 'smem constant byte address 0x4 - core index']
  #allocation1 [shape = 'u32[72,128]{1,0:T(1,128)}', space=vmem, size = 0x9000, scoped, tag = 'internal scratch']
  %s0 = inlined_call_operand.vmem [shape: f32[2,512], index: 0, kind: input, shape index: {}]
  %s1 = inlined_call_operand.hbm [shape: bf16[512,128], index: 1, kind: input, shape index: {}]
  %s2 = inlined_call_operand.vmem [shape: f32[1,128], index: 2, kind: input, shape index: {}]
  %s3 = inlined_call_operand.vmem [shape: bf16[128,64], index: 3, kind: input, shape index: {}]
  %s4 = inlined_call_operand.vmem [shape: f32[1,64], index: 4, kind: input, shape index: {}]
  %s5 = inlined_call_operand.hbm [shape: f32[2,64], index: 5, kind: output, shape index: {}]
  %s6 = sld [smem:[#allocation0]]
  $region34: #{tpu_custom_call.1} parent=0
    _
  %s8 = ssub.s32 1, %s6
  %s9 = scalar_select 0, %s8, %s6
  $region1: #{tpu_custom_call.1} parent=0
    #allocation2 [shape = 'u8[131072]{0}', space=vmem, size = 0x20000, scoped, tag = 'input window, operand 1, single buffered']
    #allocation3 [shape = 's32[1]{0}', space=sflag, size = 0x4, scoped, tag = 'scoped memory for tpu_custom_call.1']
    #allocation4 [shape = 's32[1]{0}', space=sflag, size = 0x4, scoped, tag = 'scoped memory for tpu_custom_call.1']
    #allocation5 [shape = 'u8[1024]{0}', space=vmem, size = 0x400, scoped, tag = 'output window, operand 0, single buffered']
    %10 = vsyncpa [#allocation3], 0
    %11 = vsyncpa [#allocation4], 0
    // Predicated region
    $region2: #{tpu_custom_call.1} parent=1 // pred_check
      _
    $region3: #{tpu_custom_call.1} parent=1 // pred_check_branch
      %13 = sbr.rel (0) target = $region5
    $region4: #{tpu_custom_call.1} parent=1 // pred_region
      _
    $region5: #{tpu_custom_call.1} parent=1 // pred_fallthru
      _
    // Predicated region
    $region6: #{tpu_custom_call.1} parent=1 // pred_check
      _
    $region7: #{tpu_custom_call.1} parent=1 // pred_check_branch
      %15 = sbr.rel (0) target = $region9
    $region8: #{tpu_custom_call.1} parent=1 // pred_region
      %17 = vsyncadd [#allocation3], 0
      %s18 = sshll.u32 %s1, 4
      %s19 = int_to_ptr.hbm [resolvable:$true] %s18
      %s20 = sshll.u32 [#allocation2], 4
      %s21 = int_to_ptr.vmem [resolvable:$true] %s20
      %26 = dma.hbm_to_vmem [thread:$0]  %s19, 4096, %s21, [#allocation3], 64, 64, 4
    $region9: #{tpu_custom_call.1} parent=1 // pred_fallthru
      _
    // Predicated region
    $region10: #{tpu_custom_call.1} parent=1 // pred_check
      _
    $region11: #{tpu_custom_call.1} parent=1 // pred_check_branch
      %28 = sbr.rel (0) target = $region13
    $region12: #{tpu_custom_call.1} parent=1 // pred_region
      _
    $region13: #{tpu_custom_call.1} parent=1 // pred_fallthru
      _
    // Predicated region
    $region14: #{tpu_custom_call.1} parent=1 // pred_check
      _
    $region15: #{tpu_custom_call.1} parent=1 // pred_check_branch
      %30 = sbr.rel (0) target = $region17
    $region16: #{tpu_custom_call.1} parent=1 // pred_region
      _
    $region17: #{tpu_custom_call.1} parent=1 // pred_fallthru
      _
    // Predicated region
    $region18: #{tpu_custom_call.1} parent=1 // pred_check
      _
    $region19: #{tpu_custom_call.1} parent=1 // pred_check_branch
      %32 = sbr.rel (0) target = $region21
    $region20: #{tpu_custom_call.1} parent=1 // pred_region
      _
    $region21: #{tpu_custom_call.1} parent=1 // pred_fallthru
      _
    // Predicated region
    $region22: #{tpu_custom_call.1} parent=1 // pred_check
      _
    $region23: #{tpu_custom_call.1} parent=1 // pred_check_branch
      %34 = sbr.rel (0) target = $region25
    $region24: #{tpu_custom_call.1} parent=1 // pred_region
      %36 = dma.done [#allocation3], 4096
    $region25: #{tpu_custom_call.1} parent=1 // pred_fallthru
      _
    %v37 = vld [vmem:[%s0] sm:$0xff]
    %39 = vst [vmem:[#allocation1] ss:$4 sm:$0xff] %v37
    %v40 = vld.sshfl [vmem:[#allocation1] sm:$0xff pattern:$0x73625140]
    %v41 = vld.sshfl [vmem:[#allocation1 + $0x8] sm:$0xff pattern:$0x73625140]
    %v42 = vld.sshfl [vmem:[#allocation1 + $0x10] sm:$0xff pattern:$0x73625140]
    %v43 = vld.sshfl [vmem:[#allocation1 + $0x18] sm:$0xff pattern:$0x73625140]
    %v48 = vpack.c.bf16 %v40, %v40
    %v49 = vpack.c.bf16 %v41, %v41
    %v50 = vpack.c.bf16 %v42, %v42
    %v51 = vpack.c.bf16 %v43, %v43
    %v52 = vld [vmem:[#allocation2] sm:$0xf]
    %v53 = vld [vmem:[#allocation2 + $0x4] sm:$0xf]
    %v54 = vld [vmem:[#allocation2 + $0x8] sm:$0xf]
    %v55 = vld [vmem:[#allocation2 + $0xc] sm:$0xf]
    %v56 = vld [vmem:[#allocation2 + $0x10] sm:$0xf]
    %v57 = vld [vmem:[#allocation2 + $0x14] sm:$0xf]
    %v58 = vld [vmem:[#allocation2 + $0x18] sm:$0xf]
    %v59 = vld [vmem:[#allocation2 + $0x1c] sm:$0xf]
    %v60 = vld [vmem:[#allocation2 + $0x20] sm:$0xf]
    %v61 = vld [vmem:[#allocation2 + $0x24] sm:$0xf]
    %v62 = vld [vmem:[#allocation2 + $0x28] sm:$0xf]
    %v63 = vld [vmem:[#allocation2 + $0x2c] sm:$0xf]
    %v64 = vld [vmem:[#allocation2 + $0x30] sm:$0xf]
    %v65 = vld [vmem:[#allocation2 + $0x34] sm:$0xf]
    %v66 = vld [vmem:[#allocation2 + $0x38] sm:$0xf]
    %v67 = vld [vmem:[#allocation2 + $0x3c] sm:$0xf]
    %v68 = vld [vmem:[#allocation2 + $0x40] sm:$0xf]
    %v69 = vld [vmem:[#allocation2 + $0x44] sm:$0xf]
    %v70 = vld [vmem:[#allocation2 + $0x48] sm:$0xf]
    %v71 = vld [vmem:[#allocation2 + $0x4c] sm:$0xf]
    %v72 = vld [vmem:[#allocation2 + $0x50] sm:$0xf]
    %v73 = vld [vmem:[#allocation2 + $0x54] sm:$0xf]
    %v74 = vld [vmem:[#allocation2 + $0x58] sm:$0xf]
    %v75 = vld [vmem:[#allocation2 + $0x5c] sm:$0xf]
    %v76 = vld [vmem:[#allocation2 + $0x60] sm:$0xf]
    %v77 = vld [vmem:[#allocation2 + $0x64] sm:$0xf]
    %v78 = vld [vmem:[#allocation2 + $0x68] sm:$0xf]
    %v79 = vld [vmem:[#allocation2 + $0x6c] sm:$0xf]
    %v80 = vld [vmem:[#allocation2 + $0x70] sm:$0xf]
    %v81 = vld [vmem:[#allocation2 + $0x74] sm:$0xf]
    %v82 = vld [vmem:[#allocation2 + $0x78] sm:$0xf]
    %v83 = vld [vmem:[#allocation2 + $0x7c] sm:$0xf]
    %v84 = vld [vmem:[#allocation2 + $0x80] sm:$0xf]
    %v85 = vld [vmem:[#allocation2 + $0x84] sm:$0xf]
    %v86 = vld [vmem:[#allocation2 + $0x88] sm:$0xf]
    %v87 = vld [vmem:[#allocation2 + $0x8c] sm:$0xf]
    %v88 = vld [vmem:[#allocation2 + $0x90] sm:$0xf]
    %v89 = vld [vmem:[#allocation2 + $0x94] sm:$0xf]
    %v90 = vld [vmem:[#allocation2 + $0x98] sm:$0xf]
    %v91 = vld [vmem:[#allocation2 + $0x9c] sm:$0xf]
    %v92 = vld [vmem:[#allocation2 + $0xa0] sm:$0xf]
    %v93 = vld [vmem:[#allocation2 + $0xa4] sm:$0xf]
    %v94 = vld [vmem:[#allocation2 + $0xa8] sm:$0xf]
    %v95 = vld [vmem:[#allocation2 + $0xac] sm:$0xf]
    %v96 = vld [vmem:[#allocation2 + $0xb0] sm:$0xf]
    %v97 = vld [vmem:[#allocation2 + $0xb4] sm:$0xf]
    %v98 = vld [vmem:[#allocation2 + $0xb8] sm:$0xf]
    %v99 = vld [vmem:[#allocation2 + $0xbc] sm:$0xf]
    %v100 = vld [vmem:[#allocation2 + $0xc0] sm:$0xf]
    %v101 = vld [vmem:[#allocation2 + $0xc4] sm:$0xf]
    %v102 = vld [vmem:[#allocation2 + $0xc8] sm:$0xf]
    %v103 = vld [vmem:[#allocation2 + $0xcc] sm:$0xf]
    %v104 = vld [vmem:[#allocation2 + $0xd0] sm:$0xf]
    %v105 = vld [vmem:[#allocation2 + $0xd4] sm:$0xf]
    %v106 = vld [vmem:[#allocation2 + $0xd8] sm:$0xf]
    %v107 = vld [vmem:[#allocation2 + $0xdc] sm:$0xf]
    %v108 = vld [vmem:[#allocation2 + $0xe0] sm:$0xf]
    %v109 = vld [vmem:[#allocation2 + $0xe4] sm:$0xf]
    %v110 = vld [vmem:[#allocation2 + $0xe8] sm:$0xf]
    %v111 = vld [vmem:[#allocation2 + $0xec] sm:$0xf]
    %v112 = vld [vmem:[#allocation2 + $0xf0] sm:$0xf]
    %v113 = vld [vmem:[#allocation2 + $0xf4] sm:$0xf]
    %v114 = vld [vmem:[#allocation2 + $0xf8] sm:$0xf]
    %v115 = vld [vmem:[#allocation2 + $0xfc] sm:$0xf]
    %v116 = vld [vmem:[%s2] sm:$0x1]
    %v118 = vperm.slane %v116, 0
    %v184 = vunpack.c.l.b16 %v52
    %v185 = vunpack.c.l.b16 %v53
    %v186 = vunpack.c.l.b16 %v54
    %v187 = vunpack.c.l.b16 %v55
    %v188 = vunpack.c.l.b16 %v56
    %v189 = vunpack.c.l.b16 %v57
    %v190 = vunpack.c.l.b16 %v58
    %v191 = vunpack.c.l.b16 %v59
    %v192 = vunpack.c.l.b16 %v60
    %v193 = vunpack.c.l.b16 %v61
    %v194 = vunpack.c.l.b16 %v62
    %v195 = vunpack.c.l.b16 %v63
    %v196 = vunpack.c.l.b16 %v64
    %v197 = vunpack.c.l.b16 %v65
    %v198 = vunpack.c.l.b16 %v66
    %v199 = vunpack.c.l.b16 %v67
    %v200 = vunpack.c.l.b16 %v68
    %v201 = vunpack.c.l.b16 %v69
    %v202 = vunpack.c.l.b16 %v70
    %v203 = vunpack.c.l.b16 %v71
    %v204 = vunpack.c.l.b16 %v72
    %v205 = vunpack.c.l.b16 %v73
    %v206 = vunpack.c.l.b16 %v74
    %v207 = vunpack.c.l.b16 %v75
    %v208 = vunpack.c.l.b16 %v76
    %v209 = vunpack.c.l.b16 %v77
    %v210 = vunpack.c.l.b16 %v78
    %v211 = vunpack.c.l.b16 %v79
    %v212 = vunpack.c.l.b16 %v80
    %v213 = vunpack.c.l.b16 %v81
    %v214 = vunpack.c.l.b16 %v82
    %v215 = vunpack.c.l.b16 %v83
    %v216 = vunpack.c.l.b16 %v84
    %v217 = vunpack.c.l.b16 %v85
    %v218 = vunpack.c.l.b16 %v86
    %v219 = vunpack.c.l.b16 %v87
    %v220 = vunpack.c.l.b16 %v88
    %v221 = vunpack.c.l.b16 %v89
    %v222 = vunpack.c.l.b16 %v90
    %v223 = vunpack.c.l.b16 %v91
    %v224 = vunpack.c.l.b16 %v92
    %v225 = vunpack.c.l.b16 %v93
    %v226 = vunpack.c.l.b16 %v94
    %v227 = vunpack.c.l.b16 %v95
    %v228 = vunpack.c.l.b16 %v96
    %v229 = vunpack.c.l.b16 %v97
    %v230 = vunpack.c.l.b16 %v98
    %v231 = vunpack.c.l.b16 %v99
    %v232 = vunpack.c.l.b16 %v100
    %v233 = vunpack.c.l.b16 %v101
    %v234 = vunpack.c.l.b16 %v102
    %v235 = vunpack.c.l.b16 %v103
    %v236 = vunpack.c.l.b16 %v104
    %v237 = vunpack.c.l.b16 %v105
    %v238 = vunpack.c.l.b16 %v106
    %v239 = vunpack.c.l.b16 %v107
    %v240 = vunpack.c.l.b16 %v108
    %v241 = vunpack.c.l.b16 %v109
    %v242 = vunpack.c.l.b16 %v110
    %v243 = vunpack.c.l.b16 %v111
    %v244 = vunpack.c.l.b16 %v112
    %v245 = vunpack.c.l.b16 %v113
    %v246 = vunpack.c.l.b16 %v114
    %v247 = vunpack.c.l.b16 %v115
    %v248 = vpack.c.b16 %v185, %v184
    %v249 = vpack.c.b16 %v187, %v186
    %v250 = vpack.c.b16 %v189, %v188
    %v251 = vpack.c.b16 %v191, %v190
    %v252 = vpack.c.b16 %v193, %v192
    %v253 = vpack.c.b16 %v195, %v194
    %v254 = vpack.c.b16 %v197, %v196
    %v255 = vpack.c.b16 %v199, %v198
    %v256 = vpack.c.b16 %v201, %v200
    %v257 = vpack.c.b16 %v203, %v202
    %v258 = vpack.c.b16 %v205, %v204
    %v259 = vpack.c.b16 %v207, %v206
    %v260 = vpack.c.b16 %v209, %v208
    %v261 = vpack.c.b16 %v211, %v210
    %v262 = vpack.c.b16 %v213, %v212
    %v263 = vpack.c.b16 %v215, %v214
    %v264 = vpack.c.b16 %v217, %v216
    %v265 = vpack.c.b16 %v219, %v218
    %v266 = vpack.c.b16 %v221, %v220
    %v267 = vpack.c.b16 %v223, %v222
    %v268 = vpack.c.b16 %v225, %v224
    %v269 = vpack.c.b16 %v227, %v226
    %v270 = vpack.c.b16 %v229, %v228
    %v271 = vpack.c.b16 %v231, %v230
    %v272 = vpack.c.b16 %v233, %v232
    %v273 = vpack.c.b16 %v235, %v234
    %v274 = vpack.c.b16 %v237, %v236
    %v275 = vpack.c.b16 %v239, %v238
    %v276 = vpack.c.b16 %v241, %v240
    %v277 = vpack.c.b16 %v243, %v242
    %v278 = vpack.c.b16 %v245, %v244
    %v279 = vpack.c.b16 %v247, %v246
    %312 = vmatpush.bf16.msra.mxu0 %v255
    %313 = vmatpush.bf16.msra.mxu0 %v254
    %314 = vmatpush.bf16.msra.mxu0 %v253
    %315 = vmatpush.bf16.msra.mxu0 %v252
    %316 = vmatpush.bf16.msra.mxu0 %v251
    %317 = vmatpush.bf16.msra.mxu0 %v250
    %318 = vmatpush.bf16.msra.mxu0 %v249
    %319 = vmatpush.bf16.msra.mxu0 %v248
    %320 = vmatmul.bf16.gmra.mxu0 %v48
    %v321 = vpop.f32.mrf.mxu0
    %v322 = vadd.f32 %v118, %v321
    %v323 = vpop.f32.mrf.mxu0
    %324 = vdwg.mxu0
    %325 = vmatpush.bf16.msra.mxu0 %v263
    %326 = vmatpush.bf16.msra.mxu0 %v262
    %327 = vmatpush.bf16.msra.mxu0 %v261
    %328 = vmatpush.bf16.msra.mxu0 %v260
    %329 = vmatpush.bf16.msra.mxu0 %v259
    %330 = vmatpush.bf16.msra.mxu0 %v258
    %331 = vmatpush.bf16.msra.mxu0 %v257
    %332 = vmatpush.bf16.msra.mxu0 %v256
    %333 = vmatmul.bf16.gmra.mxu0 %v49
    %v334 = vpop.f32.mrf.mxu0
    %v335 = vadd.f32 %v322, %v334
    %v336 = vpop.f32.mrf.mxu0
    %337 = vdwg.mxu0
    %338 = vmatpush.bf16.msra.mxu0 %v271
    %339 = vmatpush.bf16.msra.mxu0 %v270
    %340 = vmatpush.bf16.msra.mxu0 %v269
    %341 = vmatpush.bf16.msra.mxu0 %v268
    %342 = vmatpush.bf16.msra.mxu0 %v267
    %343 = vmatpush.bf16.msra.mxu0 %v266
    %344 = vmatpush.bf16.msra.mxu0 %v265
    %345 = vmatpush.bf16.msra.mxu0 %v264
    %346 = vmatmul.bf16.gmra.mxu0 %v50
    %v347 = vpop.f32.mrf.mxu0
    %v348 = vadd.f32 %v335, %v347
    %v349 = vpop.f32.mrf.mxu0
    %350 = vdwg.mxu0
    %351 = vmatpush.bf16.msra.mxu0 %v279
    %352 = vmatpush.bf16.msra.mxu0 %v278
    %353 = vmatpush.bf16.msra.mxu0 %v277
    %354 = vmatpush.bf16.msra.mxu0 %v276
    %355 = vmatpush.bf16.msra.mxu0 %v275
    %356 = vmatpush.bf16.msra.mxu0 %v274
    %357 = vmatpush.bf16.msra.mxu0 %v273
    %358 = vmatpush.bf16.msra.mxu0 %v272
    %359 = vmatmul.bf16.gmra.mxu0 %v51
    %v360 = vpop.f32.mrf.mxu0
    %v361 = vadd.f32 %v348, %v360
    %v362 = vpop.f32.mrf.mxu0
    %363 = vdwg.mxu0
    %v364 = vmax.f32 %v361, 0.0
    %v365 = vpack.c.bf16 %v364, %v364
    %v366 = vld [vmem:[%s3] sm:$0xf]
    %v367 = vld [vmem:[%s3 + $0x4] sm:$0xf]
    %v368 = vld [vmem:[%s3 + $0x8] sm:$0xf]
    %v369 = vld [vmem:[%s3 + $0xc] sm:$0xf]
    %v370 = vld [vmem:[%s3 + $0x10] sm:$0xf]
    %v371 = vld [vmem:[%s3 + $0x14] sm:$0xf]
    %v372 = vld [vmem:[%s3 + $0x18] sm:$0xf]
    %v373 = vld [vmem:[%s3 + $0x1c] sm:$0xf]
    %v374 = vld [vmem:[%s3 + $0x20] sm:$0xf]
    %v375 = vld [vmem:[%s3 + $0x24] sm:$0xf]
    %v376 = vld [vmem:[%s3 + $0x28] sm:$0xf]
    %v377 = vld [vmem:[%s3 + $0x2c] sm:$0xf]
    %v378 = vld [vmem:[%s3 + $0x30] sm:$0xf]
    %v379 = vld [vmem:[%s3 + $0x34] sm:$0xf]
    %v380 = vld [vmem:[%s3 + $0x38] sm:$0xf]
    %v381 = vld [vmem:[%s3 + $0x3c] sm:$0xf]
    %v382 = vld [vmem:[%s4] sm:$0x1]
    %v384 = vperm.slane %v382, 0
    %v402 = vunpack.c.l.b16 %v366
    %v403 = vunpack.c.l.b16 %v367
    %v404 = vunpack.c.l.b16 %v368
    %v405 = vunpack.c.l.b16 %v369
    %v406 = vunpack.c.l.b16 %v370
    %v407 = vunpack.c.l.b16 %v371
    %v408 = vunpack.c.l.b16 %v372
    %v409 = vunpack.c.l.b16 %v373
    %v410 = vunpack.c.l.b16 %v374
    %v411 = vunpack.c.l.b16 %v375
    %v412 = vunpack.c.l.b16 %v376
    %v413 = vunpack.c.l.b16 %v377
    %v414 = vunpack.c.l.b16 %v378
    %v415 = vunpack.c.l.b16 %v379
    %v416 = vunpack.c.l.b16 %v380
    %v417 = vunpack.c.l.b16 %v381
    %v418 = vpack.c.b16 %v403, %v402
    %v419 = vpack.c.b16 %v405, %v404
    %v420 = vpack.c.b16 %v407, %v406
    %v421 = vpack.c.b16 %v409, %v408
    %v422 = vpack.c.b16 %v411, %v410
    %v423 = vpack.c.b16 %v413, %v412
    %v424 = vpack.c.b16 %v415, %v414
    %v425 = vpack.c.b16 %v417, %v416
    %434 = vmatpush.bf16.msra.mxu0 %v425
    %435 = vmatpush.bf16.msra.mxu0 %v424
    %436 = vmatpush.bf16.msra.mxu0 %v423
    %437 = vmatpush.bf16.msra.mxu0 %v422
    %438 = vmatpush.bf16.msra.mxu0 %v421
    %439 = vmatpush.bf16.msra.mxu0 %v420
    %440 = vmatpush.bf16.msra.mxu0 %v419
    %441 = vmatpush.bf16.msra.mxu0 %v418
    %442 = vmatmul.bf16.gmra.mxu0 %v365
    %v443 = vpop.f32.mrf.mxu0
    %v444 = vadd.f32 %v384, %v443
    %v445 = vpop.f32.mrf.mxu0
    %446 = vdwg.mxu0
    %vm447 = vcmask 517120
    %448 = vst.msk [vmem:[#allocation5] sm:$0x3] %vm447, %v444
    // Predicated region
    $region26: #{tpu_custom_call.1} parent=1 // pred_check
      _
    $region27: #{tpu_custom_call.1} parent=1 // pred_check_branch
      %450 = sbr.rel (0) target = $region29
    $region28: #{tpu_custom_call.1} parent=1 // pred_region
      %452 = vsyncadd [#allocation4], 0
      %s454 = sshll.u32 [#allocation5], 4
      %s455 = int_to_ptr.vmem [resolvable:$true] %s454
      %s456 = sshll.u32 %s5, 4
      %s457 = int_to_ptr.hbm [resolvable:$true] %s456
      %459 = dma.vmem_to_hbm [thread:$0]  %s455, 32, %s457, [#allocation4]
    $region29: #{tpu_custom_call.1} parent=1 // pred_fallthru
      _
    // Predicated region
    $region30: #{tpu_custom_call.1} parent=1 // pred_check
      _
    $region31: #{tpu_custom_call.1} parent=1 // pred_check_branch
      %461 = sbr.rel (0) target = $region33
    $region32: #{tpu_custom_call.1} parent=1 // pred_region
      %463 = dma.done [#allocation4], 32
    $region33: #{tpu_custom_call.1} parent=1 // pred_fallthru
      _
    %464 = vsyncpa [#allocation3], 1
    %465 = vsyncpa [#allocation4], 1

</llo_original>
